<compile_context>
chip_gen: v5e
topology: v5e:2x2
jax: 0.10.0
libtpu: 0.0.40
codegen_flags: <defaults>
</compile_context>

<pallas_src>
import functools

import jax
import jax.numpy as jnp
from jax.experimental import pallas as pl
from jax.experimental.pallas import tpu as pltpu


def _round_up(a, b):
    return (a + b - 1) // b * b


def _complex_conv_kernel(p_ref, w_ref, b_ref, o_ref):
    """One (batch, M-tile) grid step: a single fused MXU matmul.

    p_ref: (TM, KP)   each row packs G consecutive output positions; lanes =
                      G complex patches (kh*kw taps x [real C_in | imag C_in]),
                      zero padded to a multiple of 128.
    w_ref: (KP, NPo)  block-diagonal complex weight [[Wr, Wi], [-Wi, Wr]] per
                      position group, resident in VMEM across the grid.
    b_ref: (1, NPo)   combined bias [br - bi | br + bi] tiled over the G
                      groups, zero padded.
    o_ref: (TM, NPo)  G packed outputs per row: [real C_out | imag C_out] x G.
    """
    o_ref[...] = (jnp.dot(p_ref[...], w_ref[...],
                          preferred_element_type=jnp.float32)
                  + b_ref[...])


def complex_conv(x, w_re, w_im, b_re, b_im, *, tile_rows=256,
                 compute_dtype=jnp.float32):
    """
    x:    (B, 2, C_in, H, W) float32   [axis 1: 0 = real, 1 = imag]
    w_*:  (C_out, C_in, kh, kw) float32 (PyTorch Conv2d weight layout)
    b_*:  (C_out,) float32
    returns (B, 2, C_out, Ho, Wo) float32, Ho = H-kh+1, Wo = W-kw+1.
    """
    B, two, C_in, H, W = x.shape
    assert two == 2
    C_out, c_in_w, kh, kw = w_re.shape
    assert c_in_w == C_in and w_im.shape == w_re.shape
    Ho, Wo = H - kh + 1, W - kw + 1
    assert Ho > 0 and Wo > 0

    T = kh * kw
    C2 = 2 * C_in                        # [real | imag] input channels
    N2 = 2 * C_out                       # [real | imag] output channels
    K = T * C2                           # one position's packed patch width

    # Pack G consecutive output positions per grid row so both the LHS and the
    # output are lane-dense even for tiny channel counts.
    G = max(1, 128 // N2)
    KG = G * K                           # packed LHS lanes per row (unpadded)
    KP = _round_up(KG, 128)              # lane-dense LHS width
    NG = G * N2                          # packed output lanes (unpadded)
    NPo = _round_up(NG, 128)             # lane-dense output width

    # ---- grouped im2col, built in one jit-fused host pass -----------------
    # channels-last image, lanes = [real C_in | imag C_in]
    x2 = x.reshape(B, C2, H, W).transpose(0, 2, 3, 1)            # (B, H, W, 2C)
    patches = jnp.concatenate(
        [x2[:, di:di + Ho, dj:dj + Wo, :]
         for di in range(kh) for dj in range(kw)], axis=-1)      # (B,Ho,Wo,K)
    M = Ho * Wo
    patches = patches.reshape(B, M, K)

    Mg = -(-M // G)                                   # grouped rows (ceil)
    TM = max(8, _round_up(min(tile_rows, Mg), 8))
    # keep each streamed input tile buffer modest (<= ~8 MiB)
    while TM > 8 and TM * KP * jnp.dtype(compute_dtype).itemsize > 8 * 2**20:
        TM //= 2
    TM = _round_up(TM, 8)
    n_m = -(-Mg // TM)
    Mg_pad = n_m * TM

    patches = jnp.pad(patches, ((0, 0), (0, Mg_pad * G - M), (0, 0)))
    patches = patches.reshape(B, Mg_pad, KG)
    patches = jnp.pad(patches, ((0, 0), (0, 0), (0, KP - KG)))
    patches = patches.astype(compute_dtype)

    # ---- block-diagonal complex weight ------------------------------------
    # per tap: (2C, 2N) = [[Wr, Wi], [-Wi, Wr]]  -> one real matmul computes
    # output columns [real | imag].
    wr = w_re.transpose(2, 3, 1, 0).reshape(T, C_in, C_out)
    wi = w_im.transpose(2, 3, 1, 0).reshape(T, C_in, C_out)
    wb = jnp.concatenate(
        [jnp.concatenate([wr, wi], axis=2),       # rows: real input channels
         jnp.concatenate([-wi, wr], axis=2)],     # rows: imag input channels
        axis=1).reshape(K, N2)                    # (K, 2N), taps stacked on K
    wg = jnp.einsum('gh,kn->gkhn', jnp.eye(G, dtype=wb.dtype), wb)
    wg = wg.reshape(KG, NG)
    wg = jnp.pad(wg, ((0, KP - KG), (0, NPo - NG))).astype(compute_dtype)

    # ---- combined bias [br - bi | br + bi], tiled over the G groups --------
    bc = jnp.tile(jnp.concatenate([b_re - b_im, b_re + b_im]), G)
    bc = jnp.pad(bc, (0, NPo - NG)).reshape(1, NPo).astype(jnp.float32)

    # ---- VMEM budget: actual footprint * margin, capped for v7x (64 MiB) --
    isz = jnp.dtype(compute_dtype).itemsize
    need = (2 * TM * KP * isz             # input tile, double buffered
            + 2 * TM * NPo * 4            # output tile, double buffered
            + KP * NPo * isz + NPo * 4)   # resident weight + bias
    vmem_limit = int(min(max(4 * need, 16 * 2**20), 48 * 2**20))

    out2 = pl.pallas_call(
        _complex_conv_kernel,
        out_shape=jax.ShapeDtypeStruct((B, Mg_pad, NPo), jnp.float32),
        grid=(B, n_m),
        in_specs=[
            # streamed, double-buffered patch tiles
            pl.BlockSpec((None, TM, KP), lambda b, m: (b, m, 0)),
            # weight / bias: small, fully resident across the grid
            pl.BlockSpec((KP, NPo), lambda b, m: (0, 0)),
            pl.BlockSpec((1, NPo), lambda b, m: (0, 0)),
        ],
        out_specs=pl.BlockSpec((None, TM, NPo), lambda b, m: (b, m, 0)),
        compiler_params=pltpu.CompilerParams(
            dimension_semantics=("parallel", "parallel"),
            vmem_limit_bytes=vmem_limit),
    )(patches, wg, bc)

    # ---- unpack: strip lane pad, ungroup the G positions, strip row pad ---
    o = out2[..., :NG].reshape(B, Mg_pad * G, N2)[:, :M, :]
    o = o.reshape(B, Ho, Wo, N2)
    real = o[..., :C_out].transpose(0, 3, 1, 2)
    imag = o[..., C_out:].transpose(0, 3, 1, 2)
    return jnp.stack((real, imag), axis=1)


def _reference(x, w_re, w_im, b_re, b_im):
    """Pure-JAX reference using lax conv (NCHW, stride=1, pad=0)."""
    dn = jax.lax.conv_dimension_numbers(x[:, 0].shape, w_re.shape,
                                        ('NCHW', 'OIHW', 'NCHW'))

    def conv(inp, w, b):
        y = jax.lax.conv_general_dilated(inp, w, (1, 1), 'VALID',
                                         dimension_numbers=dn)
        return y + b[None, :, None, None]

    real = conv(x[:, 0], w_re, b_re) - conv(x[:, 1], w_im, b_im)
    imag = conv(x[:, 1], w_re, b_re) + conv(x[:, 0], w_im, b_im)
    return jnp.stack((real, imag), axis=1)


if __name__ == "__main__":
    key = jax.random.PRNGKey(0)
    B, C_in, C_out, H, W, ksize = 2, 4, 8, 16, 16, 3

    k_x, k_wr, k_wi, k_br, k_bi = jax.random.split(key, 5)
    x = jax.random.normal(k_x, (B, 2, C_in, H, W), dtype=jnp.float32)
    fan_in = C_in * ksize * ksize
    scale = 1.0 / jnp.sqrt(jnp.float32(fan_in))
    w_re = jax.random.uniform(k_wr, (C_out, C_in, ksize, ksize),
                              minval=-scale, maxval=scale, dtype=jnp.float32)
    w_im = jax.random.uniform(k_wi, (C_out, C_in, ksize, ksize),
                              minval=-scale, maxval=scale, dtype=jnp.float32)
    b_re = jax.random.uniform(k_br, (C_out,), minval=-scale, maxval=scale,
                              dtype=jnp.float32)
    b_im = jax.random.uniform(k_bi, (C_out,), minval=-scale, maxval=scale,
                              dtype=jnp.float32)

    # tile_rows=8 so the small test exercises the multi-tile M grid path.
    conv = jax.jit(functools.partial(complex_conv, tile_rows=8))
    out = jax.block_until_ready(conv(x, w_re, w_im, b_re, b_im))
    ref = jax.block_until_ready(_reference(x, w_re, w_im, b_re, b_im))

    assert out.shape == (B, 2, C_out, H - ksize + 1, W - ksize + 1), out.shape
    assert jnp.allclose(out, ref, atol=2e-4, rtol=2e-4), "mismatch vs reference"
    print("KERNEL_OK")
</pallas_src>

<mosaic_0001>
module attributes {stable_mosaic.version = 11 : i64} {
  func.func @_complex_conv_kernel(%arg0: i32, %arg1: i32, %arg2: memref<1x8x640xf32, #tpu.memory_space<vmem>>, %arg3: memref<640x128xf32, #tpu.memory_space<vmem>>, %arg4: memref<1x128xf32, #tpu.memory_space<vmem>>, %arg5: memref<1x8x128xf32, #tpu.memory_space<vmem>>) attributes {dimension_semantics = [#tpu.dimension_semantics<parallel>, #tpu.dimension_semantics<parallel>], iteration_bounds = array<i64: 2, 4>, scalar_prefetch = 0 : i64, scratch_operands = 0 : i64, tpu.core_type = #tpu.core_type<tc>, window_params = [{transform_indices = @transform_0, window_bounds = array<i64: 1, 8, 640>}, {pipeline_mode = #tpu.pipeline_mode<synchronous>, transform_indices = @transform_1, window_bounds = array<i64: 640, 128>}, {pipeline_mode = #tpu.pipeline_mode<synchronous>, transform_indices = @transform_2, window_bounds = array<i64: 1, 128>}, {transform_indices = @transform_3, window_bounds = array<i64: 1, 8, 128>}]} {
    %c0 = arith.constant 0 : index
    %c0_0 = arith.constant 0 : index
    %c0_1 = arith.constant 0 : index
    %0 = vector.load %arg2[%c0, %c0_0, %c0_1] : memref<1x8x640xf32, #tpu.memory_space<vmem>>, vector<1x8x640xf32>
    %1 = vector.shape_cast %0 : vector<1x8x640xf32> to vector<8x640xf32>
    %c0_2 = arith.constant 0 : index
    %c0_3 = arith.constant 0 : index
    %2 = vector.load %arg3[%c0_2, %c0_3] : memref<640x128xf32, #tpu.memory_space<vmem>>, vector<640x128xf32>
    %cst = arith.constant dense<0.000000e+00> : vector<8x128xf32>
    %3 = tpu.matmul %1, %2, %cst {dimension_numbers = #tpu.dot_dimension_numbers<[1], [0], [0], [1], [0, 0, 1, 1], [], []>} : vector<8x640xf32>, vector<640x128xf32>, vector<8x128xf32> -> vector<8x128xf32>
    %c0_4 = arith.constant 0 : index
    %c0_5 = arith.constant 0 : index
    %4 = vector.load %arg4[%c0_4, %c0_5] : memref<1x128xf32, #tpu.memory_space<vmem>>, vector<1x128xf32>
    %5 = vector.broadcast %4 : vector<1x128xf32> to vector<8x128xf32>
    %6 = arith.addf %3, %5 : vector<8x128xf32>
    %c0_6 = arith.constant 0 : index
    %c0_7 = arith.constant 0 : index
    %c0_8 = arith.constant 0 : index
    %7 = vector.load %arg5[%c0_6, %c0_7, %c0_8] : memref<1x8x128xf32, #tpu.memory_space<vmem>>, vector<1x8x128xf32>
    %8 = vector.shape_cast %7 : vector<1x8x128xf32> to vector<8x128xf32>
    %9 = vector.shape_cast %6 : vector<8x128xf32> to vector<1x8x128xf32>
    tpu.vector_store %arg5[%c0_6, %c0_7, %c0_8], %9 {strides = array<i32>} : memref<1x8x128xf32, #tpu.memory_space<vmem>>, vector<1x8x128xf32>,
    return
  }
  func.func @transform_0(%arg0: i32, %arg1: i32) -> (i32, i32, i32) {
    %c0_i32 = arith.constant 0 : i32
    %c0_i32_0 = arith.constant 0 : i32
    return %arg0, %arg1, %c0_i32 : i32, i32, i32
  }
  func.func @transform_1(%arg0: i32, %arg1: i32) -> (i32, i32) {
    %c0_i32 = arith.constant 0 : i32
    %c0_i32_0 = arith.constant 0 : i32
    %c0_i32_1 = arith.constant 0 : i32
    return %c0_i32, %c0_i32_0 : i32, i32
  }
  func.func @transform_2(%arg0: i32, %arg1: i32) -> (i32, i32) {
    %c0_i32 = arith.constant 0 : i32
    %c0_i32_0 = arith.constant 0 : i32
    %c0_i32_1 = arith.constant 0 : i32
    return %c0_i32, %c0_i32_0 : i32, i32
  }
  func.func @transform_3(%arg0: i32, %arg1: i32) -> (i32, i32, i32) {
    %c0_i32 = arith.constant 0 : i32
    %c0_i32_0 = arith.constant 0 : i32
    return %arg0, %arg1, %c0_i32 : i32, i32, i32
  }
}

</mosaic_0001>

<llo_original>
// kernel: neg.1
$region0: #{neg.1}
  #allocation0 [shape = 's32[1]{0}', space=sflag, size = 0x4, scoped, tag = 'scoped memory for neg.1']
  %s0 = inlined_call_operand.vmem [shape: f32[9,4,8], index: 0, kind: input, shape index: {}]
  %s1 = inlined_call_operand.vmem [shape: f32[9,4,8], index: 1, kind: output, shape index: {}]
  %v2 = vld [vmem:[%s0] sm:$0xf]
  %3 = xla_tuple %v2
  %4 = xla_tuple %3
  %v5 = vxor.u32 %v2, 2147483648
  %6 = xla_tuple %v5
  %7 = vst [vmem:[%s1] sm:$0xf] %v5
  %s8 = scalar_lea.vmem %s0, 4
  %v9 = vld [vmem:[%s8] sm:$0xf]
  %10 = xla_tuple %v9
  %11 = xla_tuple %10
  %v12 = vxor.u32 %v9, 2147483648
  %13 = xla_tuple %v12
  %s14 = scalar_lea.vmem %s1, 4
  %15 = vst [vmem:[%s14] sm:$0xf] %v12
  %s16 = scalar_lea.vmem %s0, 8
  %v17 = vld [vmem:[%s16] sm:$0xf]
  %18 = xla_tuple %v17
  %19 = xla_tuple %18
  %v20 = vxor.u32 %v17, 2147483648
  %21 = xla_tuple %v20
  %s22 = scalar_lea.vmem %s1, 8
  %23 = vst [vmem:[%s22] sm:$0xf] %v20
  %s24 = scalar_lea.vmem %s0, 12
  %v25 = vld [vmem:[%s24] sm:$0xf]
  %26 = xla_tuple %v25
  %27 = xla_tuple %26
  %v28 = vxor.u32 %v25, 2147483648
  %29 = xla_tuple %v28
  %s30 = scalar_lea.vmem %s1, 12
  %31 = vst [vmem:[%s30] sm:$0xf] %v28
  %s32 = scalar_lea.vmem %s0, 16
  %v33 = vld [vmem:[%s32] sm:$0xf]
  %34 = xla_tuple %v33
  %35 = xla_tuple %34
  %v36 = vxor.u32 %v33, 2147483648
  %37 = xla_tuple %v36
  %s38 = scalar_lea.vmem %s1, 16
  %39 = vst [vmem:[%s38] sm:$0xf] %v36
  %s40 = scalar_lea.vmem %s0, 20
  %v41 = vld [vmem:[%s40] sm:$0xf]
  %42 = xla_tuple %v41
  %43 = xla_tuple %42
  %v44 = vxor.u32 %v41, 2147483648
  %45 = xla_tuple %v44
  %s46 = scalar_lea.vmem %s1, 20
  %47 = vst [vmem:[%s46] sm:$0xf] %v44
  %s48 = scalar_lea.vmem %s0, 24
  %v49 = vld [vmem:[%s48] sm:$0xf]
  %50 = xla_tuple %v49
  %51 = xla_tuple %50
  %v52 = vxor.u32 %v49, 2147483648
  %53 = xla_tuple %v52
  %s54 = scalar_lea.vmem %s1, 24
  %55 = vst [vmem:[%s54] sm:$0xf] %v52
  %s56 = scalar_lea.vmem %s0, 28
  %v57 = vld [vmem:[%s56] sm:$0xf]
  %58 = xla_tuple %v57
  %59 = xla_tuple %58
  %v60 = vxor.u32 %v57, 2147483648
  %61 = xla_tuple %v60
  %s62 = scalar_lea.vmem %s1, 28
  %63 = vst [vmem:[%s62] sm:$0xf] %v60
  %s64 = scalar_lea.vmem %s0, 32
  %v65 = vld [vmem:[%s64] sm:$0xf]
  %66 = xla_tuple %v65
  %67 = xla_tuple %66
  %v68 = vxor.u32 %v65, 2147483648
  %69 = xla_tuple %v68
  %s70 = scalar_lea.vmem %s1, 32
  %71 = vst [vmem:[%s70] sm:$0xf] %v68

// kernel: tile.8
$region0: #{tile.8}
  #allocation0 [shape = 's32[1]{0}', space=sflag, size = 0x4, scoped, tag = 'scoped memory for tile.8']
  %s0 = inlined_call_operand.vmem [shape: f32[16], index: 0, kind: input, shape index: {}]
  %s1 = inlined_call_operand.vmem [shape: f32[8,16], index: 1, kind: output, shape index: {}]
  // Predicated region
  $region2: #{tile.8} parent=0 // pred_check
    _
  $region3: #{tile.8} parent=0 // pred_check_branch
    %3 = sbr.rel (0) target = $region5
  $region4: #{tile.8} parent=0 // pred_region
    _
  $region5: #{tile.8} parent=0 // pred_fallthru
    _
  %v4 = vld [vmem:[%s0] ss:$0 sm:$0xff]
  %5 = vst [vmem:[%s1] sm:$0xff] %v4

// kernel: complex_conv.1
$region0: #{complex_conv.1}
  #allocation0 [shape = 'u32[]', space=smem, size = 0x4, offset = 0x4, fixed_abs, tag = 'smem constant byte address 0x4 - core index']
  #allocation1 [shape = 'u32[72,128]{1,0:T(1,128)}', space=vmem, size = 0x9000, scoped, tag = 'internal scratch']
  %s0 = inlined_call_operand.vmem [shape: f32[2,32,640], index: 0, kind: input, shape index: {}]
  %s1 = inlined_call_operand.vmem [shape: f32[640,128], index: 1, kind: input, shape index: {}]
  %s2 = inlined_call_operand.vmem [shape: f32[1,128], index: 2, kind: input, shape index: {}]
  %s3 = inlined_call_operand.vmem [shape: f32[2,32,128], index: 3, kind: output, shape index: {}]
  %s4 = sld [smem:[#allocation0]]
  $region45: #{complex_conv.1} parent=0
    _
  %s6 = ssub.s32 1, %s4
  %s7 = scalar_select 0, %s6, %s4
  loop: start=0, step=1, limit=10
  $region2: #{complex_conv.1} parent=0 // loop_pre_header
    _
  $region3: #{complex_conv.1} parent=0 // loop_header
    %s9 = sphi 0, %s13
    %p10 = scmp.ge.s32.totalorder %s9, 10
    %s16 = sphi 0, %s28
    %s17 = sphi 0, %s24
    %s18 = sphi 0, %s16
    %s19 = sphi 0, %s17
    %s20 = sphi 0, %s18
    %s21 = sphi 0, %s19
    %s33 = sphi 0, %s35
    %s36 = sphi 0, %s33
    %s37 = sphi 0, %s36
    %s53 = sphi 0, %s37
    %s57 = sphi 0, %s57
    %s59 = sphi 0, %s57
    %s60 = sphi 0, %s59
    %s74 = sphi 0, %s60
    %s78 = sphi 0, %s78
    %s80 = sphi 0, %s78
    %s81 = sphi 0, %s80
    %s95 = sphi 0, %s81
    %s103 = sphi 0, %s105
    %s106 = sphi 0, %s103
    %s107 = sphi 0, %s106
    %s123 = sphi 0, %s107
  $region4: #{complex_conv.1} parent=0 // loop_header_branch
    %12 = sbr.rel (%p10) target = $region8
  $region5: #{complex_conv.1} parent=0 // loop_body
    %s14 = ssub.s32 %s9, 1
    %s15 = ssub.s32 %s9, 2
    %s22 = sadd.s32 1, %s17
    %p23 = scmp.ge.s32.totalorder %s22, 4
    %s24 = scalar_select %p23, 0, %s22
    %s25 = sadd.s32 1, %s16
    %s26 = scalar_select %p23, %s25, %s16
    %p27 = scmp.ge.s32.totalorder %s26, 2
    %s28 = scalar_select %p27, 0, %s26
    %s29 = ssub.s32 %s16, %s28
    %s30 = ssub.s32 %s17, %s24
    %s31 = sor.u32 %s29, %s30
    %p32 = scmp.eq.s32.totalorder %s31, 0
    %s34 = sadd.s32 %s33, 1
    %s35 = scalar_select %p32, %s33, %s34
    %p38 = pneg %p32
    %p39 = scmp.eq.s32.totalorder %s9, 7
    %p40 = por %p38, %p39
    %p41 = scmp.ne.s32.totalorder %s33, %s36
    %p42 = scmp.eq.s32.totalorder %s9, 0
    %p43 = por %p41, %p42
    %p44 = scmp.ne.s32.totalorder %s33, %s36
    %p45 = scmp.eq.s32.totalorder %s14, 7
    %p46 = por %p44, %p45
    %p47 = scmp.ne.s32.totalorder %s36, %s37
    %p48 = scmp.eq.s32.totalorder %s14, 0
    %p49 = por %p47, %p48
    %p50 = scmp.ne.s32.totalorder %s36, %s37
    %p51 = scmp.eq.s32.totalorder %s15, 7
    %p52 = por %p50, %p51
    %p54 = scmp.ne.s32.totalorder %s37, %s53
    %p55 = scmp.eq.s32.totalorder %s15, 0
    %p56 = por %p54, %p55
    %s58 = sadd.s32 %s57, 1
    %p61 = scmp.eq.s32.totalorder %s9, 7
    %p62 = scmp.ne.s32.totalorder %s57, %s59
    %p63 = scmp.eq.s32.totalorder %s9, 0
    %p64 = por %p62, %p63
    %p65 = scmp.ne.s32.totalorder %s57, %s59
    %p66 = scmp.eq.s32.totalorder %s14, 7
    %p67 = por %p65, %p66
    %p68 = scmp.ne.s32.totalorder %s59, %s60
    %p69 = scmp.eq.s32.totalorder %s14, 0
    %p70 = por %p68, %p69
    %p71 = scmp.ne.s32.totalorder %s59, %s60
    %p72 = scmp.eq.s32.totalorder %s15, 7
    %p73 = por %p71, %p72
    %p75 = scmp.ne.s32.totalorder %s60, %s74
    %p76 = scmp.eq.s32.totalorder %s15, 0
    %p77 = por %p75, %p76
    %s79 = sadd.s32 %s78, 1
    %p82 = scmp.eq.s32.totalorder %s9, 7
    %p83 = scmp.ne.s32.totalorder %s78, %s80
    %p84 = scmp.eq.s32.totalorder %s9, 0
    %p85 = por %p83, %p84
    %p86 = scmp.ne.s32.totalorder %s78, %s80
    %p87 = scmp.eq.s32.totalorder %s14, 7
    %p88 = por %p86, %p87
    %p89 = scmp.ne.s32.totalorder %s80, %s81
    %p90 = scmp.eq.s32.totalorder %s14, 0
    %p91 = por %p89, %p90
    %p92 = scmp.ne.s32.totalorder %s80, %s81
    %p93 = scmp.eq.s32.totalorder %s15, 7
    %p94 = por %p92, %p93
    %p96 = scmp.ne.s32.totalorder %s81, %s95
    %p97 = scmp.eq.s32.totalorder %s15, 0
    %p98 = por %p96, %p97
    %s99 = ssub.s32 %s16, %s28
    %s100 = ssub.s32 %s17, %s24
    %s101 = sor.u32 %s99, %s100
    %p102 = scmp.eq.s32.totalorder %s101, 0
    %s104 = sadd.s32 %s103, 1
    %s105 = scalar_select %p102, %s103, %s104
    %p108 = pneg %p102
    %p109 = scmp.eq.s32.totalorder %s9, 7
    %p110 = por %p108, %p109
    %p111 = scmp.ne.s32.totalorder %s103, %s106
    %p112 = scmp.eq.s32.totalorder %s9, 0
    %p113 = por %p111, %p112
    %p114 = scmp.ne.s32.totalorder %s103, %s106
    %p115 = scmp.eq.s32.totalorder %s14, 7
    %p116 = por %p114, %p115
    %p117 = scmp.ne.s32.totalorder %s106, %s107
    %p118 = scmp.eq.s32.totalorder %s14, 0
    %p119 = por %p117, %p118
    %p120 = scmp.ne.s32.totalorder %s106, %s107
    %p121 = scmp.eq.s32.totalorder %s15, 7
    %p122 = por %p120, %p121
    %p124 = scmp.ne.s32.totalorder %s107, %s123
    %p125 = scmp.eq.s32.totalorder %s15, 0
    %p126 = por %p124, %p125
    %p127 = scmp.le.s32.totalorder 1, %s9
    %p128 = scmp.lt.s32.totalorder %s9, 9
    %p129 = pnand %p127, %p128
    %p130 = pneg %p129
    // Predicated region
    $region9: #{complex_conv.1} parent=5 // pred_check
      _
    $region10: #{complex_conv.1} parent=5 // pred_check_branch
      %132 = sbr.rel (%p129) target = $region12
    $region11: #{complex_conv.1} parent=5 // pred_region
      %s133 = ssub.s32 %s9, 1
      // Predicated region
      $region13: #{complex_conv.1} parent=11 // pred_check
        %p134 = pneg %p70
      $region14: #{complex_conv.1} parent=11 // pred_check_branch
        %136 = sbr.rel (%p134) target = $region16
      $region15: #{complex_conv.1} parent=11 // pred_region
        _
      $region16: #{complex_conv.1} parent=11 // pred_fallthru
        _
      // Predicated region
      $region17: #{complex_conv.1} parent=11 // pred_check
        %p137 = pneg %p91
      $region18: #{complex_conv.1} parent=11 // pred_check_branch
        %139 = sbr.rel (%p137) target = $region20
      $region19: #{complex_conv.1} parent=11 // pred_region
        _
      $region20: #{complex_conv.1} parent=11 // pred_fallthru
        _
    $region12: #{complex_conv.1} parent=5 // pred_fallthru
      _
    %p140 = scmp.lt.s32.totalorder %s9, 8
    // Predicated region
    $region21: #{complex_conv.1} parent=5 // pred_check
      %p141 = pneg %p140
    $region22: #{complex_conv.1} parent=5 // pred_check_branch
      %143 = sbr.rel (%p141) target = $region24
    $region23: #{complex_conv.1} parent=5 // pred_region
      // Predicated region
      $region25: #{complex_conv.1} parent=23 // pred_check
        %p144 = pneg %p43
      $region26: #{complex_conv.1} parent=23 // pred_check_branch
        %146 = sbr.rel (%p144) target = $region28
      $region27: #{complex_conv.1} parent=23 // pred_region
        %p147 = scmp.lt.s32.totalorder %s16, 1
        %s148 = scalar_select %p147, %s16, 1
        %p149 = scmp.lt.s32.totalorder %s17, 3
        %s150 = scalar_select %p149, %s17, 3
        %s151 = smul.addr %s150, 5
        %s152 = smul.addr %s148, 20
        %s153 = sadd.s32 %s151, %s152
        %s154 = smul.addr %s153, 8
        %s155 = scalar_lea.vmem %s0, %s154
      $region28: #{complex_conv.1} parent=23 // pred_fallthru
        _
    $region24: #{complex_conv.1} parent=5 // pred_fallthru
      _
    %p156 = scmp.le.s32.totalorder 1, %s9
    %p157 = scmp.lt.s32.totalorder %s9, 9
    %p158 = pnand %p156, %p157
    %p159 = pneg %p158
    // Predicated region
    $region29: #{complex_conv.1} parent=5 // pred_check
      _
    $region30: #{complex_conv.1} parent=5 // pred_check_branch
      %161 = sbr.rel (%p158) target = $region32
    $region31: #{complex_conv.1} parent=5 // pred_region
      %s162 = ssub.s32 %s9, 1
      %p163 = scmp.lt.s32.totalorder %s18, 1
      %s164 = scalar_select %p163, %s18, 1
      %p165 = scmp.lt.s32.totalorder %s19, 3
      %s166 = scalar_select %p165, %s19, 3
      %s167 = smul.addr %s166, 5
      %s168 = smul.addr %s164, 20
      %s169 = sadd.s32 %s167, %s168
      %s170 = smul.addr %s169, 8
      %s171 = scalar_lea.vmem %s0, %s170
      %p172 = pneg %p49
      %p173 = pneg %p46
      %p174 = pneg %p70
      %p175 = pneg %p67
      %p176 = pneg %p91
      %p177 = pneg %p88
      %p178 = pneg %p119
      %p179 = pneg %p116
      %p180 = scmp.lt.s32.totalorder %s18, 1
      %s181 = scalar_select %p180, %s18, 1
      %p182 = scmp.lt.s32.totalorder %s19, 3
      %s183 = scalar_select %p182, %s19, 3
      %s184 = smul.addr %s181, 4
      %s185 = sadd.s32 %s183, %s184
      %s186 = smul.addr %s185, 8
      %s187 = scalar_lea.vmem %s3, %s186
      %p188 = scmp.lt.s32.totalorder %s18, 1
      %s189 = scalar_select %p188, %s18, 1
      %p190 = scmp.lt.s32.totalorder %s19, 3
      %s191 = scalar_select %p190, %s19, 3
      %s192 = smul.addr %s191, 5
      %s193 = smul.addr %s189, 20
      %s194 = sadd.s32 %s192, %s193
      %s195 = smul.addr %s194, 8
      %s196 = scalar_lea.vmem %s0, %s195
      %p197 = scmp.lt.s32.totalorder %s18, 1
      %s198 = scalar_select %p197, %s18, 1
      %p199 = scmp.lt.s32.totalorder %s19, 3
      %s200 = scalar_select %p199, %s19, 3
      %s201 = smul.addr %s198, 4
      %s202 = sadd.s32 %s200, %s201
      %s203 = smul.addr %s202, 8
      %s204 = scalar_lea.vmem %s3, %s203
      %v205 = vld [vmem:[%s196] sm:$0xff]
      %v206 = vld [vmem:[%s196 + $0x8] sm:$0xff]
      %v207 = vld [vmem:[%s196 + $0x10] sm:$0xff]
      %v208 = vld [vmem:[%s196 + $0x18] sm:$0xff]
      %v209 = vld [vmem:[%s196 + $0x20] sm:$0xff]
      %v210 = vld [vmem:[%s1] sm:$0xff]
      %v211 = vld [vmem:[%s1 + $0x8] sm:$0xff]
      %v212 = vld [vmem:[%s1 + $0x10] sm:$0xff]
      %v213 = vld [vmem:[%s1 + $0x18] sm:$0xff]
      %v214 = vld [vmem:[%s1 + $0x20] sm:$0xff]
      %v215 = vld [vmem:[%s1 + $0x28] sm:$0xff]
      %v216 = vld [vmem:[%s1 + $0x30] sm:$0xff]
      %v217 = vld [vmem:[%s1 + $0x38] sm:$0xff]
      %v218 = vld [vmem:[%s1 + $0x40] sm:$0xff]
      %v219 = vld [vmem:[%s1 + $0x48] sm:$0xff]
      %v220 = vld [vmem:[%s1 + $0x50] sm:$0xff]
      %v221 = vld [vmem:[%s1 + $0x58] sm:$0xff]
      %v222 = vld [vmem:[%s1 + $0x60] sm:$0xff]
      %v223 = vld [vmem:[%s1 + $0x68] sm:$0xff]
      %v224 = vld [vmem:[%s1 + $0x70] sm:$0xff]
      %v225 = vld [vmem:[%s1 + $0x78] sm:$0xff]
      %v226 = vld [vmem:[%s1 + $0x80] sm:$0xff]
      %v227 = vld [vmem:[%s1 + $0x88] sm:$0xff]
      %v228 = vld [vmem:[%s1 + $0x90] sm:$0xff]
      %v229 = vld [vmem:[%s1 + $0x98] sm:$0xff]
      %v230 = vld [vmem:[%s1 + $0xa0] sm:$0xff]
      %v231 = vld [vmem:[%s1 + $0xa8] sm:$0xff]
      %v232 = vld [vmem:[%s1 + $0xb0] sm:$0xff]
      %v233 = vld [vmem:[%s1 + $0xb8] sm:$0xff]
      %v234 = vld [vmem:[%s1 + $0xc0] sm:$0xff]
      %v235 = vld [vmem:[%s1 + $0xc8] sm:$0xff]
      %v236 = vld [vmem:[%s1 + $0xd0] sm:$0xff]
      %v237 = vld [vmem:[%s1 + $0xd8] sm:$0xff]
      %v238 = vld [vmem:[%s1 + $0xe0] sm:$0xff]
      %v239 = vld [vmem:[%s1 + $0xe8] sm:$0xff]
      %v240 = vld [vmem:[%s1 + $0xf0] sm:$0xff]
      %v241 = vld [vmem:[%s1 + $0xf8] sm:$0xff]
      %v242 = vld [vmem:[%s1 + $0x100] sm:$0xff]
      %v243 = vld [vmem:[%s1 + $0x108] sm:$0xff]
      %v244 = vld [vmem:[%s1 + $0x110] sm:$0xff]
      %v245 = vld [vmem:[%s1 + $0x118] sm:$0xff]
      %v246 = vld [vmem:[%s1 + $0x120] sm:$0xff]
      %v247 = vld [vmem:[%s1 + $0x128] sm:$0xff]
      %v248 = vld [vmem:[%s1 + $0x130] sm:$0xff]
      %v249 = vld [vmem:[%s1 + $0x138] sm:$0xff]
      %v250 = vld [vmem:[%s1 + $0x140] sm:$0xff]
      %v251 = vld [vmem:[%s1 + $0x148] sm:$0xff]
      %v252 = vld [vmem:[%s1 + $0x150] sm:$0xff]
      %v253 = vld [vmem:[%s1 + $0x158] sm:$0xff]
      %v254 = vld [vmem:[%s1 + $0x160] sm:$0xff]
      %v255 = vld [vmem:[%s1 + $0x168] sm:$0xff]
      %v256 = vld [vmem:[%s1 + $0x170] sm:$0xff]
      %v257 = vld [vmem:[%s1 + $0x178] sm:$0xff]
      %v258 = vld [vmem:[%s1 + $0x180] sm:$0xff]
      %v259 = vld [vmem:[%s1 + $0x188] sm:$0xff]
      %v260 = vld [vmem:[%s1 + $0x190] sm:$0xff]
      %v261 = vld [vmem:[%s1 + $0x198] sm:$0xff]
      %v262 = vld [vmem:[%s1 + $0x1a0] sm:$0xff]
      %v263 = vld [vmem:[%s1 + $0x1a8] sm:$0xff]
      %v264 = vld [vmem:[%s1 + $0x1b0] sm:$0xff]
      %v265 = vld [vmem:[%s1 + $0x1b8] sm:$0xff]
      %v266 = vld [vmem:[%s1 + $0x1c0] sm:$0xff]
      %v267 = vld [vmem:[%s1 + $0x1c8] sm:$0xff]
      %v268 = vld [vmem:[%s1 + $0x1d0] sm:$0xff]
      %v269 = vld [vmem:[%s1 + $0x1d8] sm:$0xff]
      %v270 = vld [vmem:[%s1 + $0x1e0] sm:$0xff]
      %v271 = vld [vmem:[%s1 + $0x1e8] sm:$0xff]
      %v272 = vld [vmem:[%s1 + $0x1f0] sm:$0xff]
      %v273 = vld [vmem:[%s1 + $0x1f8] sm:$0xff]
      %v274 = vld [vmem:[%s1 + $0x200] sm:$0xff]
      %v275 = vld [vmem:[%s1 + $0x208] sm:$0xff]
      %v276 = vld [vmem:[%s1 + $0x210] sm:$0xff]
      %v277 = vld [vmem:[%s1 + $0x218] sm:$0xff]
      %v278 = vld [vmem:[%s1 + $0x220] sm:$0xff]
      %v279 = vld [vmem:[%s1 + $0x228] sm:$0xff]
      %v280 = vld [vmem:[%s1 + $0x230] sm:$0xff]
      %v281 = vld [vmem:[%s1 + $0x238] sm:$0xff]
      %v282 = vld [vmem:[%s1 + $0x240] sm:$0xff]
      %v283 = vld [vmem:[%s1 + $0x248] sm:$0xff]
      %v284 = vld [vmem:[%s1 + $0x250] sm:$0xff]
      %v285 = vld [vmem:[%s1 + $0x258] sm:$0xff]
      %v286 = vld [vmem:[%s1 + $0x260] sm:$0xff]
      %v287 = vld [vmem:[%s1 + $0x268] sm:$0xff]
      %v288 = vld [vmem:[%s1 + $0x270] sm:$0xff]
      %v289 = vld [vmem:[%s1 + $0x278] sm:$0xff]
      %v290 = vld [vmem:[%s2] sm:$0x1]
      %v292 = vperm.slane %v290, 0
      %294 = vmatpush.msra.mxu0 %v225
      %295 = vmatpush.msra.mxu0 %v224
      %296 = vmatpush.msra.mxu0 %v223
      %297 = vmatpush.msra.mxu0 %v222
      %298 = vmatpush.msra.mxu0 %v221
      %299 = vmatpush.msra.mxu0 %v220
      %300 = vmatpush.msra.mxu0 %v219
      %301 = vmatpush.msra.mxu0 %v218
      %302 = vmatpush.msra.mxu0 %v217
      %303 = vmatpush.msra.mxu0 %v216
      %304 = vmatpush.msra.mxu0 %v215
      %305 = vmatpush.msra.mxu0 %v214
      %306 = vmatpush.msra.mxu0 %v213
      %307 = vmatpush.msra.mxu0 %v212
      %308 = vmatpush.msra.mxu0 %v211
      %309 = vmatpush.msra.mxu0 %v210
      %310 = vmatmul.f32.gmra.mxu0 %v205
      %v311 = vpop.f32.mrf.mxu0
      %v312 = vadd.f32 %v292, %v311
      %313 = vdwg.mxu0
      %314 = vmatpush.msra.mxu0 %v241
      %315 = vmatpush.msra.mxu0 %v240
      %316 = vmatpush.msra.mxu0 %v239
      %317 = vmatpush.msra.mxu0 %v238
      %318 = vmatpush.msra.mxu0 %v237
      %319 = vmatpush.msra.mxu0 %v236
      %320 = vmatpush.msra.mxu0 %v235
      %321 = vmatpush.msra.mxu0 %v234
      %322 = vmatpush.msra.mxu0 %v233
      %323 = vmatpush.msra.mxu0 %v232
      %324 = vmatpush.msra.mxu0 %v231
      %325 = vmatpush.msra.mxu0 %v230
      %326 = vmatpush.msra.mxu0 %v229
      %327 = vmatpush.msra.mxu0 %v228
      %328 = vmatpush.msra.mxu0 %v227
      %329 = vmatpush.msra.mxu0 %v226
      %330 = vmatmul.f32.gmra.mxu0 %v206
      %v331 = vpop.f32.mrf.mxu0
      %v332 = vadd.f32 %v312, %v331
      %333 = vdwg.mxu0
      %334 = vmatpush.msra.mxu0 %v257
      %335 = vmatpush.msra.mxu0 %v256
      %336 = vmatpush.msra.mxu0 %v255
      %337 = vmatpush.msra.mxu0 %v254
      %338 = vmatpush.msra.mxu0 %v253
      %339 = vmatpush.msra.mxu0 %v252
      %340 = vmatpush.msra.mxu0 %v251
      %341 = vmatpush.msra.mxu0 %v250
      %342 = vmatpush.msra.mxu0 %v249
      %343 = vmatpush.msra.mxu0 %v248
      %344 = vmatpush.msra.mxu0 %v247
      %345 = vmatpush.msra.mxu0 %v246
      %346 = vmatpush.msra.mxu0 %v245
      %347 = vmatpush.msra.mxu0 %v244
      %348 = vmatpush.msra.mxu0 %v243
      %349 = vmatpush.msra.mxu0 %v242
      %350 = vmatmul.f32.gmra.mxu0 %v207
      %v351 = vpop.f32.mrf.mxu0
      %v352 = vadd.f32 %v332, %v351
      %353 = vdwg.mxu0
      %354 = vmatpush.msra.mxu0 %v273
      %355 = vmatpush.msra.mxu0 %v272
      %356 = vmatpush.msra.mxu0 %v271
      %357 = vmatpush.msra.mxu0 %v270
      %358 = vmatpush.msra.mxu0 %v269
      %359 = vmatpush.msra.mxu0 %v268
      %360 = vmatpush.msra.mxu0 %v267
      %361 = vmatpush.msra.mxu0 %v266
      %362 = vmatpush.msra.mxu0 %v265
      %363 = vmatpush.msra.mxu0 %v264
      %364 = vmatpush.msra.mxu0 %v263
      %365 = vmatpush.msra.mxu0 %v262
      %366 = vmatpush.msra.mxu0 %v261
      %367 = vmatpush.msra.mxu0 %v260
      %368 = vmatpush.msra.mxu0 %v259
      %369 = vmatpush.msra.mxu0 %v258
      %370 = vmatmul.f32.gmra.mxu0 %v208
      %v371 = vpop.f32.mrf.mxu0
      %v372 = vadd.f32 %v352, %v371
      %373 = vdwg.mxu0
      %374 = vmatpush.msra.mxu0 %v289
      %375 = vmatpush.msra.mxu0 %v288
      %376 = vmatpush.msra.mxu0 %v287
      %377 = vmatpush.msra.mxu0 %v286
      %378 = vmatpush.msra.mxu0 %v285
      %379 = vmatpush.msra.mxu0 %v284
      %380 = vmatpush.msra.mxu0 %v283
      %381 = vmatpush.msra.mxu0 %v282
      %382 = vmatpush.msra.mxu0 %v281
      %383 = vmatpush.msra.mxu0 %v280
      %384 = vmatpush.msra.mxu0 %v279
      %385 = vmatpush.msra.mxu0 %v278
      %386 = vmatpush.msra.mxu0 %v277
      %387 = vmatpush.msra.mxu0 %v276
      %388 = vmatpush.msra.mxu0 %v275
      %389 = vmatpush.msra.mxu0 %v274
      %390 = vmatmul.f32.gmra.mxu0 %v209
      %v391 = vpop.f32.mrf.mxu0
      %v392 = vadd.f32 %v372, %v391
      %393 = vdwg.mxu0
      %394 = vst [vmem:[%s204] sm:$0xff] %v392
      %p395 = scmp.lt.s32.totalorder %s18, 1
      %s396 = scalar_select %p395, %s18, 1
      %p397 = scmp.lt.s32.totalorder %s19, 3
      %s398 = scalar_select %p397, %s19, 3
      %s399 = smul.addr %s396, 4
      %s400 = sadd.s32 %s398, %s399
      %s401 = smul.addr %s400, 8
      %s402 = scalar_lea.vmem %s3, %s401
      // Predicated region
      $region33: #{complex_conv.1} parent=31 // pred_check
        %p403 = pneg %p116
      $region34: #{complex_conv.1} parent=31 // pred_check_branch
        %405 = sbr.rel (%p403) target = $region36
      $region35: #{complex_conv.1} parent=31 // pred_region
        _
      $region36: #{complex_conv.1} parent=31 // pred_fallthru
        _
    $region32: #{complex_conv.1} parent=5 // pred_fallthru
      _
    %p406 = scmp.le.s32.totalorder 2, %s9
    // Predicated region
    $region37: #{complex_conv.1} parent=5 // pred_check
      %p407 = pneg %p406
    $region38: #{complex_conv.1} parent=5 // pred_check_branch
      %409 = sbr.rel (%p407) target = $region40
    $region39: #{complex_conv.1} parent=5 // pred_region
      %s410 = ssub.s32 %s9, 2
      // Predicated region
      $region41: #{complex_conv.1} parent=39 // pred_check
        %p411 = pneg %p122
      $region42: #{complex_conv.1} parent=39 // pred_check_branch
        %413 = sbr.rel (%p411) target = $region44
      $region43: #{complex_conv.1} parent=39 // pred_region
        %p414 = scmp.lt.s32.totalorder %s20, 1
        %s415 = scalar_select %p414, %s20, 1
        %p416 = scmp.lt.s32.totalorder %s21, 3
        %s417 = scalar_select %p416, %s21, 3
        %s418 = smul.addr %s415, 4
        %s419 = sadd.s32 %s417, %s418
        %s420 = smul.addr %s419, 8
        %s421 = scalar_lea.vmem %s3, %s420
      $region44: #{complex_conv.1} parent=39 // pred_fallthru
        _
    $region40: #{complex_conv.1} parent=5 // pred_fallthru
      _
  $region6: #{complex_conv.1} parent=0 // loop_footer
    %s13 = sadd.s32 1, %s9
  $region7: #{complex_conv.1} parent=0 // loop_footer_branch
    %8 = sbr.rel target = $region3
  $region8: #{complex_conv.1} parent=0 // loop_exit
    _

</llo_original>
